<compile_context>
chip_gen: v5e
topology: v5e:2x2
jax: 0.10.0
libtpu: 0.0.40
codegen_flags: <defaults>
</compile_context>

<pallas_src>
import functools

import jax
import jax.numpy as jnp
from jax import lax
from jax.experimental import pallas as pl
from jax.experimental.pallas import tpu as pltpu


def _orthogonal(key, shape, gain=0.01, dtype=jnp.float32):
    """Deterministic orthogonal init (like nn.init.orthogonal_), shape=[out,in]."""
    rows, cols = shape
    n = max(rows, cols)
    a = jax.random.normal(key, (n, n), dtype=jnp.float32)
    q, r = jnp.linalg.qr(a)
    q = q * jnp.sign(jnp.diag(r))[None, :]   # sign fix -> unique decomposition
    return (gain * q[:rows, :cols]).astype(dtype)


def mappo_actor_kernel(x_ref, w1_ref, b1_ref, w2_ref, b2_ref, w3_ref, b3_ref,
                       out_ref):
    # x_ref : [block_b, state_dim]  f32 (batch-major, as produced upstream)
    # w*    : PyTorch-native [out, in];  b* : [out, 1]
    # out   : [action_dim, block_b]     (batch on lanes -> lane-dense stores)
    x = x_ref[...].astype(jnp.bfloat16)                      # [tb, S]

    # Linear 1 + ReLU:  h1 = W1 @ x^T  (contract the shared feature axis; the
    # MXU handles the transposed rhs, so no explicit XLU transpose is needed).
    w1 = w1_ref[...].astype(jnp.bfloat16)                    # [H, S]
    h1 = lax.dot_general(w1, x, (((1,), (1,)), ((), ())),
                         preferred_element_type=jnp.float32)  # [H, tb]
    h1 = jnp.maximum(h1 + b1_ref[...], 0.0)                   # bias [H,1] -> lanes

    # Linear 2 + ReLU
    w2 = w2_ref[...].astype(jnp.bfloat16)                     # [H, H]
    h2 = jnp.dot(w2, h1.astype(jnp.bfloat16),
                 preferred_element_type=jnp.float32)          # [H, tb]
    h2 = jnp.maximum(h2 + b2_ref[...], 0.0)

    # Linear 3 (logits)
    w3 = w3_ref[...].astype(jnp.bfloat16)                     # [A, H]
    logits = jnp.dot(w3, h2.astype(jnp.bfloat16),
                     preferred_element_type=jnp.float32)      # [A, tb]
    logits = logits + b3_ref[...]

    # Numerically stable softmax over the action dim (axis 0 = sublanes, cheap
    # XLU reduce).  Exact normalization so rows sum to 1 to f32 precision.
    m = jnp.max(logits, axis=0, keepdims=True)                # [1, tb]
    e = jnp.exp(logits - m)
    denom = jnp.sum(e, axis=0, keepdims=True)                 # [1, tb]
    out_ref[...] = (e / denom).astype(out_ref.dtype)


def _round_up(x, m):
    return ((x + m - 1) // m) * m


def _pick_block_b(batch):
    """Generation-aware batch tile (batch maps to lanes -> multiples of 128).

    v5e: cap 4096 (16 MiB default scoped VMEM; the [tb, state_dim] f32 block is
    lane-padded to 128 lanes and double-buffered).  v6e/v7x: cap 8192.  Only on
    dual-TensorCore v7x do we force a >=2-step grid so the 'parallel' axis can
    span both cores; on 1-TC chips fewer, bigger steps win.
    """
    kind = ""
    try:
        kind = jax.devices()[0].device_kind.lower()
    except Exception:
        pass
    cap = 4096 if "v5" in kind else 8192
    two_tc = "v7" in kind
    if batch <= 128 or (not two_tc and batch <= cap):
        return batch                      # single full-array block, grid = 1
    if two_tc:
        return min(cap, _round_up(pl.cdiv(batch, 2), 128))
    return cap


@functools.partial(jax.jit, static_argnames=("block_b",))
def _mappo_actor_pallas(state, w1, b1, w2, b2, w3, b3, *, block_b):
    B, state_dim = state.shape
    hidden_dim = w1.shape[0]
    action_dim = w3.shape[0]

    # Biases as [out, 1] so they broadcast across the lane (batch) axis.
    b1c = b1.reshape(hidden_dim, 1).astype(jnp.float32)
    b2c = b2.reshape(hidden_dim, 1).astype(jnp.float32)
    b3c = b3.reshape(action_dim, 1).astype(jnp.float32)

    grid = (pl.cdiv(B, block_b),)

    in_specs = [
        pl.BlockSpec((block_b, state_dim), lambda i: (i, 0)),      # x tile
        pl.BlockSpec((hidden_dim, state_dim), lambda i: (0, 0)),   # w1 [H,S]
        pl.BlockSpec((hidden_dim, 1), lambda i: (0, 0)),           # b1 [H,1]
        pl.BlockSpec((hidden_dim, hidden_dim), lambda i: (0, 0)),  # w2 [H,H]
        pl.BlockSpec((hidden_dim, 1), lambda i: (0, 0)),           # b2 [H,1]
        pl.BlockSpec((action_dim, hidden_dim), lambda i: (0, 0)),  # w3 [A,H]
        pl.BlockSpec((action_dim, 1), lambda i: (0, 0)),           # b3 [A,1]
    ]
    out_specs = pl.BlockSpec((action_dim, block_b), lambda i: (0, i))

    probs_t = pl.pallas_call(
        mappo_actor_kernel,
        out_shape=jax.ShapeDtypeStruct((action_dim, B), jnp.float32),
        grid_spec=pltpu.PrefetchScalarGridSpec(
            num_scalar_prefetch=0,
            grid=grid,
            in_specs=in_specs,
            out_specs=out_specs,
        ),
        compiler_params=pltpu.CompilerParams(
            dimension_semantics=("parallel",)),
    )(state, w1, b1c, w2, b2c, w3, b3c)

    # Back to the module's [batch, action_dim] layout (tiny 8-wide transpose).
    return probs_t.T


def mappo_actor_forward(state, w1, b1, w2, b2, w3, b3, *, block_b=None):
    """Public wrapper.  state: [B, state_dim]; weights PyTorch-native [out,in];
    biases [out].  Returns action probabilities [B, action_dim]."""
    B = state.shape[0]
    if block_b is None:
        block_b = _pick_block_b(B)
    return _mappo_actor_pallas(state, w1, b1, w2, b2, w3, b3,
                               block_b=int(block_b))


def _reference(state, w1, b1, w2, b2, w3, b3):
    """Same math as the PyTorch module, with the kernel's bf16 MXU inputs /
    f32 accumulation so tolerances are tight."""
    xb = state.astype(jnp.bfloat16)
    h1 = jnp.maximum(
        jnp.dot(xb, w1.astype(jnp.bfloat16).T,
                preferred_element_type=jnp.float32) + b1, 0.0)
    h2 = jnp.maximum(
        jnp.dot(h1.astype(jnp.bfloat16), w2.astype(jnp.bfloat16).T,
                preferred_element_type=jnp.float32) + b2, 0.0)
    logits = jnp.dot(h2.astype(jnp.bfloat16), w3.astype(jnp.bfloat16).T,
                     preferred_element_type=jnp.float32) + b3
    return jax.nn.softmax(logits, axis=-1)


if __name__ == "__main__":
    # Shapes consistent with the module: state [B, state_dim] -> probs [B, action_dim]
    state_dim, hidden_dim, action_dim = 16, 32, 8

    key = jax.random.PRNGKey(0)
    k_state, k_w1, k_w2, k_w3, k_state2 = jax.random.split(key, 5)

    # PyTorch-native parameters: weight [out, in] (orthogonal, gain=0.01), bias [out]=0.
    w1 = _orthogonal(k_w1, (hidden_dim, state_dim))
    b1 = jnp.zeros((hidden_dim,), jnp.float32)
    w2 = _orthogonal(k_w2, (hidden_dim, hidden_dim))
    b2 = jnp.zeros((hidden_dim,), jnp.float32)
    w3 = _orthogonal(k_w3, (action_dim, hidden_dim))
    b3 = jnp.zeros((action_dim,), jnp.float32)

    # Case 1: small batch -> single full-array block, grid = 1.
    batch = 12
    state = jax.random.normal(k_state, (batch, state_dim), jnp.float32)
    probs = jax.block_until_ready(
        mappo_actor_forward(state, w1, b1, w2, b2, w3, b3))
    ref = _reference(state, w1, b1, w2, b2, w3, b3)
    assert probs.shape == (batch, action_dim)
    assert jnp.allclose(jnp.sum(probs, axis=-1), 1.0, atol=1e-4)
    assert jnp.allclose(probs, ref, atol=2e-3, rtol=2e-3)

    # Case 2: ragged batch with a forced small tile -> multi-step lane-dense
    # grid + Pallas edge-block masking of the partial last tile.
    batch2 = 300
    state2 = jax.random.normal(k_state2, (batch2, state_dim), jnp.float32)
    probs2 = jax.block_until_ready(
        mappo_actor_forward(state2, w1, b1, w2, b2, w3, b3, block_b=128))
    ref2 = _reference(state2, w1, b1, w2, b2, w3, b3)
    assert probs2.shape == (batch2, action_dim)
    assert jnp.allclose(jnp.sum(probs2, axis=-1), 1.0, atol=1e-4)
    assert jnp.allclose(probs2, ref2, atol=2e-3, rtol=2e-3)

    # Case 3: same batch, auto-picked tile (exercises the generation-aware path).
    probs3 = jax.block_until_ready(
        mappo_actor_forward(state2, w1, b1, w2, b2, w3, b3))
    assert jnp.allclose(probs3, ref2, atol=2e-3, rtol=2e-3)

    print("KERNEL_OK")
</pallas_src>

<mosaic_0001>
module attributes {stable_mosaic.version = 11 : i64} {
  func.func @mappo_actor_kernel(%arg0: i32, %arg1: memref<12x16xf32, #tpu.memory_space<vmem>>, %arg2: memref<32x16xf32, #tpu.memory_space<vmem>>, %arg3: memref<32x1xf32, #tpu.memory_space<vmem>>, %arg4: memref<32x32xf32, #tpu.memory_space<vmem>>, %arg5: memref<32x1xf32, #tpu.memory_space<vmem>>, %arg6: memref<8x32xf32, #tpu.memory_space<vmem>>, %arg7: memref<8x1xf32, #tpu.memory_space<vmem>>, %arg8: memref<8x12xf32, #tpu.memory_space<vmem>>) attributes {dimension_semantics = [#tpu.dimension_semantics<parallel>], iteration_bounds = array<i64: 1>, scalar_prefetch = 0 : i64, scratch_operands = 0 : i64, tpu.core_type = #tpu.core_type<tc>, window_params = [{transform_indices = @transform_0, window_bounds = array<i64: 12, 16>}, {pipeline_mode = #tpu.pipeline_mode<synchronous>, transform_indices = @transform_1, window_bounds = array<i64: 32, 16>}, {pipeline_mode = #tpu.pipeline_mode<synchronous>, transform_indices = @transform_2, window_bounds = array<i64: 32, 1>}, {pipeline_mode = #tpu.pipeline_mode<synchronous>, transform_indices = @transform_3, window_bounds = array<i64: 32, 32>}, {pipeline_mode = #tpu.pipeline_mode<synchronous>, transform_indices = @transform_4, window_bounds = array<i64: 32, 1>}, {pipeline_mode = #tpu.pipeline_mode<synchronous>, transform_indices = @transform_5, window_bounds = array<i64: 8, 32>}, {pipeline_mode = #tpu.pipeline_mode<synchronous>, transform_indices = @transform_6, window_bounds = array<i64: 8, 1>}, {transform_indices = @transform_7, window_bounds = array<i64: 8, 12>}]} {
    %c0 = arith.constant 0 : index
    %c0_0 = arith.constant 0 : index
    %0 = vector.load %arg1[%c0, %c0_0] : memref<12x16xf32, #tpu.memory_space<vmem>>, vector<12x16xf32>
    %1 = arith.truncf %0 : vector<12x16xf32> to vector<12x16xbf16>
    %c0_1 = arith.constant 0 : index
    %c0_2 = arith.constant 0 : index
    %2 = vector.load %arg2[%c0_1, %c0_2] : memref<32x16xf32, #tpu.memory_space<vmem>>, vector<32x16xf32>
    %3 = arith.truncf %2 : vector<32x16xf32> to vector<32x16xbf16>
    %cst = arith.constant dense<0.000000e+00> : vector<32x12xf32>
    %4 = tpu.matmul %3, %1, %cst {dimension_numbers = #tpu.dot_dimension_numbers<[1], [1], [0], [0], [0, 0, 1, 0], [], []>} : vector<32x16xbf16>, vector<12x16xbf16>, vector<32x12xf32> -> vector<32x12xf32>
    %c0_3 = arith.constant 0 : index
    %c0_4 = arith.constant 0 : index
    %5 = vector.load %arg3[%c0_3, %c0_4] : memref<32x1xf32, #tpu.memory_space<vmem>>, vector<32x1xf32>
    %6 = vector.broadcast %5 : vector<32x1xf32> to vector<32x12xf32>
    %7 = arith.addf %4, %6 : vector<32x12xf32>
    %cst_5 = arith.constant 0.000000e+00 : f32
    %8 = vector.broadcast %cst_5 : f32 to vector<32x12xf32>
    %9 = arith.maximumf %7, %8 : vector<32x12xf32>
    %c0_6 = arith.constant 0 : index
    %c0_7 = arith.constant 0 : index
    %10 = vector.load %arg4[%c0_6, %c0_7] : memref<32x32xf32, #tpu.memory_space<vmem>>, vector<32x32xf32>
    %11 = arith.truncf %10 : vector<32x32xf32> to vector<32x32xbf16>
    %12 = arith.truncf %9 : vector<32x12xf32> to vector<32x12xbf16>
    %cst_8 = arith.constant dense<0.000000e+00> : vector<32x12xf32>
    %13 = tpu.matmul %11, %12, %cst_8 {dimension_numbers = #tpu.dot_dimension_numbers<[1], [0], [0], [1], [0, 0, 1, 1], [], []>} : vector<32x32xbf16>, vector<32x12xbf16>, vector<32x12xf32> -> vector<32x12xf32>
    %c0_9 = arith.constant 0 : index
    %c0_10 = arith.constant 0 : index
    %14 = vector.load %arg5[%c0_9, %c0_10] : memref<32x1xf32, #tpu.memory_space<vmem>>, vector<32x1xf32>
    %15 = vector.broadcast %14 : vector<32x1xf32> to vector<32x12xf32>
    %16 = arith.addf %13, %15 : vector<32x12xf32>
    %cst_11 = arith.constant 0.000000e+00 : f32
    %17 = vector.broadcast %cst_11 : f32 to vector<32x12xf32>
    %18 = arith.maximumf %16, %17 : vector<32x12xf32>
    %c0_12 = arith.constant 0 : index
    %c0_13 = arith.constant 0 : index
    %19 = vector.load %arg6[%c0_12, %c0_13] : memref<8x32xf32, #tpu.memory_space<vmem>>, vector<8x32xf32>
    %20 = arith.truncf %19 : vector<8x32xf32> to vector<8x32xbf16>
    %21 = arith.truncf %18 : vector<32x12xf32> to vector<32x12xbf16>
    %cst_14 = arith.constant dense<0.000000e+00> : vector<8x12xf32>
    %22 = tpu.matmul %20, %21, %cst_14 {dimension_numbers = #tpu.dot_dimension_numbers<[1], [0], [0], [1], [0, 0, 1, 1], [], []>} : vector<8x32xbf16>, vector<32x12xbf16>, vector<8x12xf32> -> vector<8x12xf32>
    %c0_15 = arith.constant 0 : index
    %c0_16 = arith.constant 0 : index
    %23 = vector.load %arg7[%c0_15, %c0_16] : memref<8x1xf32, #tpu.memory_space<vmem>>, vector<8x1xf32>
    %24 = vector.broadcast %23 : vector<8x1xf32> to vector<8x12xf32>
    %25 = arith.addf %22, %24 : vector<8x12xf32>
    %cst_17 = arith.constant dense<0xFF800000> : vector<12xf32>
    %26 = vector.multi_reduction <maximumf>, %25, %cst_17 [0] : vector<8x12xf32> to vector<12xf32>
    %27 = vector.shape_cast %26 : vector<12xf32> to vector<1x12xf32>
    %28 = vector.broadcast %27 : vector<1x12xf32> to vector<8x12xf32>
    %29 = arith.subf %25, %28 : vector<8x12xf32>
    %30 = math.exp %29 : vector<8x12xf32>
    %cst_18 = arith.constant dense<0.000000e+00> : vector<12xf32>
    %31 = vector.multi_reduction <add>, %30, %cst_18 [0] : vector<8x12xf32> to vector<12xf32>
    %32 = vector.shape_cast %31 : vector<12xf32> to vector<1x12xf32>
    %33 = vector.broadcast %32 : vector<1x12xf32> to vector<8x12xf32>
    %34 = arith.divf %30, %33 : vector<8x12xf32>
    %c0_19 = arith.constant 0 : index
    %c0_20 = arith.constant 0 : index
    %35 = vector.load %arg8[%c0_19, %c0_20] : memref<8x12xf32, #tpu.memory_space<vmem>>, vector<8x12xf32>
    tpu.vector_store %arg8[%c0_19, %c0_20], %34 {strides = array<i32>} : memref<8x12xf32, #tpu.memory_space<vmem>>, vector<8x12xf32>,
    return
  }
  func.func @transform_0(%arg0: i32) -> (i32, i32) {
    %c0_i32 = arith.constant 0 : i32
    %c0_i32_0 = arith.constant 0 : i32
    return %arg0, %c0_i32 : i32, i32
  }
  func.func @transform_1(%arg0: i32) -> (i32, i32) {
    %c0_i32 = arith.constant 0 : i32
    %c0_i32_0 = arith.constant 0 : i32
    %c0_i32_1 = arith.constant 0 : i32
    return %c0_i32, %c0_i32_0 : i32, i32
  }
  func.func @transform_2(%arg0: i32) -> (i32, i32) {
    %c0_i32 = arith.constant 0 : i32
    %c0_i32_0 = arith.constant 0 : i32
    %c0_i32_1 = arith.constant 0 : i32
    return %c0_i32, %c0_i32_0 : i32, i32
  }
  func.func @transform_3(%arg0: i32) -> (i32, i32) {
    %c0_i32 = arith.constant 0 : i32
    %c0_i32_0 = arith.constant 0 : i32
    %c0_i32_1 = arith.constant 0 : i32
    return %c0_i32, %c0_i32_0 : i32, i32
  }
  func.func @transform_4(%arg0: i32) -> (i32, i32) {
    %c0_i32 = arith.constant 0 : i32
    %c0_i32_0 = arith.constant 0 : i32
    %c0_i32_1 = arith.constant 0 : i32
    return %c0_i32, %c0_i32_0 : i32, i32
  }
  func.func @transform_5(%arg0: i32) -> (i32, i32) {
    %c0_i32 = arith.constant 0 : i32
    %c0_i32_0 = arith.constant 0 : i32
    %c0_i32_1 = arith.constant 0 : i32
    return %c0_i32, %c0_i32_0 : i32, i32
  }
  func.func @transform_6(%arg0: i32) -> (i32, i32) {
    %c0_i32 = arith.constant 0 : i32
    %c0_i32_0 = arith.constant 0 : i32
    %c0_i32_1 = arith.constant 0 : i32
    return %c0_i32, %c0_i32_0 : i32, i32
  }
  func.func @transform_7(%arg0: i32) -> (i32, i32) {
    %c0_i32 = arith.constant 0 : i32
    %c0_i32_0 = arith.constant 0 : i32
    return %c0_i32, %arg0 : i32, i32
  }
}

</mosaic_0001>

<llo_original>
// kernel: _mappo_actor_pallas.1
$region0: #{_mappo_actor_pallas.1}
  #allocation0 [shape = 'u32[]', space=smem, size = 0x4, offset = 0x4, fixed_abs, tag = 'smem constant byte address 0x4 - core index']
  #allocation1 [shape = 'u32[72,128]{1,0:T(1,128)}', space=vmem, size = 0x9000, scoped, tag = 'internal scratch']
  %s0 = inlined_call_operand.vmem [shape: f32[12,16], index: 0, kind: input, shape index: {}]
  %s1 = inlined_call_operand.vmem [shape: f32[32,16], index: 1, kind: input, shape index: {}]
  %s2 = inlined_call_operand.vmem [shape: f32[32,1], index: 2, kind: input, shape index: {}]
  %s3 = inlined_call_operand.vmem [shape: f32[32,32], index: 3, kind: input, shape index: {}]
  %s4 = inlined_call_operand.vmem [shape: f32[32,1], index: 4, kind: input, shape index: {}]
  %s5 = inlined_call_operand.vmem [shape: f32[8,32], index: 5, kind: input, shape index: {}]
  %s6 = inlined_call_operand.vmem [shape: f32[8,1], index: 6, kind: input, shape index: {}]
  %s7 = inlined_call_operand.hbm [shape: f32[8,12], index: 7, kind: output, shape index: {}]
  %s8 = sld [smem:[#allocation0]]
  $region38: #{_mappo_actor_pallas.1} parent=0
    _
  %s10 = ssub.s32 1, %s8
  %s11 = scalar_select 0, %s10, %s8
  $region1: #{_mappo_actor_pallas.1} parent=0
    #allocation2 [shape = 'u8[4096]{0}', space=vmem, size = 0x1000, scoped, tag = 'output window, operand 0, single buffered']
    #allocation3 [shape = 's32[1]{0}', space=sflag, size = 0x4, scoped, tag = 'scoped memory for _mappo_actor_pallas.1']
    %12 = vsyncpa [#allocation3], 0
    // Predicated region
    $region2: #{_mappo_actor_pallas.1} parent=1 // pred_check
      _
    $region3: #{_mappo_actor_pallas.1} parent=1 // pred_check_branch
      %14 = sbr.rel (0) target = $region5
    $region4: #{_mappo_actor_pallas.1} parent=1 // pred_region
      _
    $region5: #{_mappo_actor_pallas.1} parent=1 // pred_fallthru
      _
    // Predicated region
    $region6: #{_mappo_actor_pallas.1} parent=1 // pred_check
      _
    $region7: #{_mappo_actor_pallas.1} parent=1 // pred_check_branch
      %16 = sbr.rel (0) target = $region9
    $region8: #{_mappo_actor_pallas.1} parent=1 // pred_region
      _
    $region9: #{_mappo_actor_pallas.1} parent=1 // pred_fallthru
      _
    // Predicated region
    $region10: #{_mappo_actor_pallas.1} parent=1 // pred_check
      _
    $region11: #{_mappo_actor_pallas.1} parent=1 // pred_check_branch
      %18 = sbr.rel (0) target = $region13
    $region12: #{_mappo_actor_pallas.1} parent=1 // pred_region
      _
    $region13: #{_mappo_actor_pallas.1} parent=1 // pred_fallthru
      _
    // Predicated region
    $region14: #{_mappo_actor_pallas.1} parent=1 // pred_check
      _
    $region15: #{_mappo_actor_pallas.1} parent=1 // pred_check_branch
      %20 = sbr.rel (0) target = $region17
    $region16: #{_mappo_actor_pallas.1} parent=1 // pred_region
      _
    $region17: #{_mappo_actor_pallas.1} parent=1 // pred_fallthru
      _
    // Predicated region
    $region18: #{_mappo_actor_pallas.1} parent=1 // pred_check
      _
    $region19: #{_mappo_actor_pallas.1} parent=1 // pred_check_branch
      %22 = sbr.rel (0) target = $region21
    $region20: #{_mappo_actor_pallas.1} parent=1 // pred_region
      _
    $region21: #{_mappo_actor_pallas.1} parent=1 // pred_fallthru
      _
    // Predicated region
    $region22: #{_mappo_actor_pallas.1} parent=1 // pred_check
      _
    $region23: #{_mappo_actor_pallas.1} parent=1 // pred_check_branch
      %24 = sbr.rel (0) target = $region25
    $region24: #{_mappo_actor_pallas.1} parent=1 // pred_region
      _
    $region25: #{_mappo_actor_pallas.1} parent=1 // pred_fallthru
      _
    // Predicated region
    $region26: #{_mappo_actor_pallas.1} parent=1 // pred_check
      _
    $region27: #{_mappo_actor_pallas.1} parent=1 // pred_check_branch
      %26 = sbr.rel (0) target = $region29
    $region28: #{_mappo_actor_pallas.1} parent=1 // pred_region
      _
    $region29: #{_mappo_actor_pallas.1} parent=1 // pred_fallthru
      _
    %v28 = vld [vmem:[%s0] sm:$0xff]
    %v29 = vld [vmem:[%s0 + $0x8] sm:$0xf]
    %v30 = vpack.c.bf16 %v29, %v28
    %v31 = vld [vmem:[%s1] sm:$0xff]
    %v32 = vld [vmem:[%s1 + $0x8] sm:$0xff]
    %v33 = vld [vmem:[%s1 + $0x10] sm:$0xff]
    %v34 = vld [vmem:[%s1 + $0x18] sm:$0xff]
    %v35 = vpack.c.bf16 %v32, %v31
    %v36 = vpack.c.bf16 %v34, %v33
    %v37 = vld [vmem:[%s2] sm:$0xff]
    %v38 = vld [vmem:[%s2 + $0x8] sm:$0xff]
    %v39 = vld [vmem:[%s2 + $0x10] sm:$0xff]
    %v40 = vld [vmem:[%s2 + $0x18] sm:$0xff]
    %42 = vset.pattern.permute.xlu0 0
    %43 = vperm.xlu0 %42, %v37
    %v44 = vpop.permute.xlu0 %43
    %47 = vset.pattern.permute.xlu0 0
    %48 = vperm.xlu0 %47, %v38
    %v49 = vpop.permute.xlu0 %48
    %52 = vset.pattern.permute.xlu0 0
    %53 = vperm.xlu0 %52, %v39
    %v54 = vpop.permute.xlu0 %53
    %57 = vset.pattern.permute.xlu0 0
    %58 = vperm.xlu0 %57, %v40
    %v59 = vpop.permute.xlu0 %58
    %vm61 = vcmask 130048
    %v63 = vsel %vm61, %v35, 0
    %v66 = vsel %vm61, %v36, 0
    %v69 = vsel %vm61, %v30, 0
    %71 = vmatpush.bf16.xpose.msra.mxu0 0
    %72 = vmatpush.bf16.xpose.msra.mxu0 0
    %73 = vmatpush.bf16.xpose.msra.mxu0 0
    %74 = vmatpush.bf16.xpose.msra.mxu0 0
    %75 = vmatpush.bf16.xpose.msra.mxu0 0
    %76 = vmatpush.bf16.xpose.msra.mxu0 0
    %77 = vmatpush.bf16.xpose.msra.mxu0 0
    %78 = vmatpush.bf16.xpose.msra.mxu0 %v69
    %79 = vmatmul.bf16.gmra.mxu0 %v63
    %v80 = vpop.f32.mrf.mxu0
    %v81 = vadd.f32 %v44, %v80
    %v82 = vpop.f32.mrf.mxu0
    %v83 = vadd.f32 %v49, %v82
    %84 = vmatmul.bf16.gmra.mxu0 %v66
    %v85 = vpop.f32.mrf.mxu0
    %v86 = vadd.f32 %v54, %v85
    %v87 = vpop.f32.mrf.mxu0
    %v88 = vadd.f32 %v59, %v87
    %89 = vdwg.mxu0
    %v90 = vmax.f32 %v81, 0.0
    %v91 = vmax.f32 %v83, 0.0
    %v92 = vmax.f32 %v86, 0.0
    %v93 = vmax.f32 %v88, 0.0
    %v94 = vld [vmem:[%s3] sm:$0xff]
    %v95 = vld [vmem:[%s3 + $0x8] sm:$0xff]
    %v96 = vld [vmem:[%s3 + $0x10] sm:$0xff]
    %v97 = vld [vmem:[%s3 + $0x18] sm:$0xff]
    %v98 = vpack.c.bf16 %v95, %v94
    %v99 = vpack.c.bf16 %v97, %v96
    %v100 = vpack.c.bf16 %v91, %v90
    %v101 = vpack.c.bf16 %v93, %v92
    %v102 = vld [vmem:[%s4] sm:$0xff]
    %v103 = vld [vmem:[%s4 + $0x8] sm:$0xff]
    %v104 = vld [vmem:[%s4 + $0x10] sm:$0xff]
    %v105 = vld [vmem:[%s4 + $0x18] sm:$0xff]
    %107 = vset.pattern.permute.xlu0 0
    %108 = vperm.xlu0 %107, %v102
    %v109 = vpop.permute.xlu0 %108
    %112 = vset.pattern.permute.xlu0 0
    %113 = vperm.xlu0 %112, %v103
    %v114 = vpop.permute.xlu0 %113
    %117 = vset.pattern.permute.xlu0 0
    %118 = vperm.xlu0 %117, %v104
    %v119 = vpop.permute.xlu0 %118
    %122 = vset.pattern.permute.xlu0 0
    %123 = vperm.xlu0 %122, %v105
    %v124 = vpop.permute.xlu0 %123
    %vm126 = vcmask 261120
    %v128 = vsel %vm126, %v98, 0
    %v131 = vsel %vm126, %v99, 0
    %133 = vmatpush.bf16.msra.mxu0 0
    %134 = vmatpush.bf16.msra.mxu0 0
    %135 = vmatpush.bf16.msra.mxu0 0
    %136 = vmatpush.bf16.msra.mxu0 0
    %137 = vmatpush.bf16.msra.mxu0 0
    %138 = vmatpush.bf16.msra.mxu0 0
    %139 = vmatpush.bf16.msra.mxu0 %v101
    %140 = vmatpush.bf16.msra.mxu0 %v100
    %141 = vmatmul.bf16.gmra.mxu0 %v128
    %v142 = vpop.f32.mrf.mxu0
    %v143 = vadd.f32 %v109, %v142
    %v144 = vpop.f32.mrf.mxu0
    %v145 = vadd.f32 %v114, %v144
    %146 = vmatmul.bf16.gmra.mxu0 %v131
    %v147 = vpop.f32.mrf.mxu0
    %v148 = vadd.f32 %v119, %v147
    %v149 = vpop.f32.mrf.mxu0
    %v150 = vadd.f32 %v124, %v149
    %151 = vdwg.mxu0
    %v152 = vmax.f32 %v143, 0.0
    %v153 = vmax.f32 %v145, 0.0
    %v154 = vmax.f32 %v148, 0.0
    %v155 = vmax.f32 %v150, 0.0
    %v156 = vld [vmem:[%s5] sm:$0xff]
    %v157 = vpack.c.bf16 %v156, %v156
    %v158 = vpack.c.bf16 %v153, %v152
    %v159 = vpack.c.bf16 %v155, %v154
    %v160 = vld [vmem:[%s6] sm:$0xff]
    %162 = vset.pattern.permute.xlu0 0
    %163 = vperm.xlu0 %162, %v160
    %v164 = vpop.permute.xlu0 %163
    %v167 = vsel %vm126, %v157, 0
    %169 = vmatpush.bf16.msra.mxu0 0
    %170 = vmatpush.bf16.msra.mxu0 0
    %171 = vmatpush.bf16.msra.mxu0 0
    %172 = vmatpush.bf16.msra.mxu0 0
    %173 = vmatpush.bf16.msra.mxu0 0
    %174 = vmatpush.bf16.msra.mxu0 0
    %175 = vmatpush.bf16.msra.mxu0 %v159
    %176 = vmatpush.bf16.msra.mxu0 %v158
    %177 = vmatmul.bf16.gmra.mxu0 %v167
    %v178 = vpop.f32.mrf.mxu0
    %v179 = vadd.f32 %v164, %v178
    %v180 = vpop.f32.mrf.mxu0
    %181 = vdwg.mxu0
    %vm182 = vcmask 97280
    %v183 = vsel %vm182, %v179, -inf
    %v184 = vrot.slane %v183, 4
    %v185 = vmax.f32 %v183, %v184
    %v186 = vrot.slane %v185, 2
    %v187 = vmax.f32 %v185, %v186
    %v188 = vrot.slane %v187, 1
    %v189 = vmax.f32 %v187, %v188
    %v190 = vsub.f32 %v179, %v189
    %v191 = vmul.f32 %v190, 1.442695
    %v192 = vpow.pop %v191
    %v193 = vsel %vm182, %v192, 0.0
    %v194 = vrot.slane %v193, 4
    %v195 = vadd.f32 %v193, %v194
    %v196 = vrot.slane %v195, 2
    %v197 = vadd.f32 %v195, %v196
    %v198 = vrot.slane %v197, 1
    %v199 = vadd.f32 %v197, %v198
    %v200 = vrcp.pop %v199
    %v201 = vmul.f32 %v199, %v200
    %v202 = vsub.f32 1.0, %v201
    %v203 = vmul.f32 %v200, %v202
    %v204 = vadd.f32 %v200, %v203
    %vm205 = vweird.f32 %v199
    %vm206 = vweird.f32 %v200
    %vm207 = vmor %vm205, %vm206
    %v208 = vsel %vm207, %v200, %v204
    %v209 = vand.u32 2147483647, %v199
    %vm210 = vcmp.eq.f32.partialorder %v209, 8.507059e+37
    %v211 = vand.u32 %v199, 2147483648
    %v212 = vor.u32 1.1754944e-38, %v211
    %v213 = vsel %vm210, %v212, %v208
    %v214 = vmul.f32 %v192, %v213
    %215 = vst.msk [vmem:[#allocation2] sm:$0xff] %vm182, %v214
    // Predicated region
    $region30: #{_mappo_actor_pallas.1} parent=1 // pred_check
      _
    $region31: #{_mappo_actor_pallas.1} parent=1 // pred_check_branch
      %217 = sbr.rel (0) target = $region33
    $region32: #{_mappo_actor_pallas.1} parent=1 // pred_region
      %219 = vsyncadd [#allocation3], 0
      %s221 = sshll.u32 [#allocation2], 4
      %s222 = int_to_ptr.vmem [resolvable:$true] %s221
      %s223 = sshll.u32 %s7, 4
      %s224 = int_to_ptr.hbm [resolvable:$true] %s223
      %226 = dma.vmem_to_hbm [thread:$0]  %s222, 128, %s224, [#allocation3]
    $region33: #{_mappo_actor_pallas.1} parent=1 // pred_fallthru
      _
    // Predicated region
    $region34: #{_mappo_actor_pallas.1} parent=1 // pred_check
      _
    $region35: #{_mappo_actor_pallas.1} parent=1 // pred_check_branch
      %228 = sbr.rel (0) target = $region37
    $region36: #{_mappo_actor_pallas.1} parent=1 // pred_region
      %230 = dma.done [#allocation3], 128
    $region37: #{_mappo_actor_pallas.1} parent=1 // pred_fallthru
      _
    %231 = vsyncpa [#allocation3], 1

</llo_original>
